<compile_context>
chip_gen: v7x
topology: tpu7x:2x2x1
jax: 0.10.0
libtpu: 0.0.40
codegen_flags: <defaults>
</compile_context>

<pallas_src>
import numpy as np
import jax
import jax.numpy as jnp
from jax.experimental import pallas as pl
from jax.experimental.pallas import tpu as pltpu

N_STATES = 4        # e.g. CartPole-v1 observation_space.shape[0]
HIDDEN = 64
TB_CAP = 2048       # batch-tile width cap (lanes) per grid step (sweep 1024/2048/4096)


def critic_kernel(x_ref, w1_ref, w2_ref, c_ref, o_ref):
    x = x_ref[...]                        # [TB, N_STATES]  batch-major state tile
    c = c_ref[...]                        # [HIDDEN, 4]     packed constants
    b1 = c[:, 0:1]                        # [H, 1]
    b2 = c[:, 1:2]                        # [H, 1]
    w3 = c[:, 2:3]                        # [H, 1]
    b3 = c[0:1, 3:4]                      # [1, 1]

    # Layer 1: contract the tiny feature axis of the batch-major tile against
    # w1's feature axis (transposed-RHS dot_general) -> feature-major [H, TB].
    # The "transpose" happens on-chip instead of as a wrapper HBM pass.
    h1 = jax.lax.dot_general(
        w1_ref[...], x, (((1,), (1,)), ((), ())),
        preferred_element_type=jnp.float32) + b1
    h1 = jnp.maximum(h1, 0.0)

    # Layer 2: standard MXU matmul, feature-major.
    h2 = jnp.dot(w2_ref[...], h1, preferred_element_type=jnp.float32) + b2
    h2 = jnp.maximum(h2, 0.0)             # [H, TB]

    # Layer 3 on VPU/XLU: broadcast-mul + sublane reduce over the 64 features.
    out = jnp.sum(w3 * h2, axis=0, keepdims=True) + b3    # [1, TB] lane-dense
    o_ref[...] = out.astype(o_ref.dtype)


def _ceil_div(a, b):
    return -(-a // b)


def _tile_plan(B):
    """Adaptive batch tiling: bounded padding; >= 2 even grid steps for v7x."""
    n_steps = max(1, _ceil_div(B, TB_CAP))
    if B > 128:
        n_steps = max(n_steps, 2)          # keep both v7x TensorCores busy
    if n_steps > 1 and n_steps % 2:
        n_steps += 1                       # even split across the 2 TCs
    TB = _ceil_div(_ceil_div(B, n_steps), 128) * 128
    return TB, n_steps


@jax.jit
def critic_forward(state, packed_params):
    """state: [B, N_STATES] float -> value: [B, 1] float32."""
    w1, w2, consts = packed_params
    B = state.shape[0]
    if B == 0:                             # guard empty batches
        return jnp.zeros((0, 1), jnp.float32)

    TB, n_steps = _tile_plan(B)
    Bp = TB * n_steps
    # Only wrapper-side data prep left: batch pad (elided by XLA when Bp == B).
    x = jnp.pad(state.astype(jnp.float32), ((0, Bp - B), (0, 0)))

    const = lambda a: pl.BlockSpec(a.shape, lambda i: (0, 0))    # VMEM-resident weights

    out = pl.pallas_call(
        critic_kernel,
        out_shape=jax.ShapeDtypeStruct((1, Bp), jnp.float32),
        grid_spec=pltpu.PrefetchScalarGridSpec(
            num_scalar_prefetch=0,
            grid=(n_steps,),
            in_specs=[
                pl.BlockSpec((TB, N_STATES), lambda i: (i, 0)),  # streamed state tiles
                const(w1), const(w2), const(consts),
            ],
            out_specs=pl.BlockSpec((1, TB), lambda i: (0, i)),   # lane-dense output
        ),
        compiler_params=pltpu.CompilerParams(
            dimension_semantics=("parallel",)),                  # 2-TC sharding on v7x
        cost_estimate=pl.CostEstimate(
            flops=2 * Bp * (N_STATES * HIDDEN + HIDDEN * HIDDEN + HIDDEN),
            transcendentals=0,
            bytes_accessed=4 * (Bp * N_STATES + Bp
                                + HIDDEN * N_STATES + HIDDEN * HIDDEN + HIDDEN * 4)),
    )(x, w1, w2, consts)

    return out[:, :B].T                    # [B, 1]  (slice/transpose are layout-trivial)


def init_params(key):
    # PyTorch nn.Linear default init: U[-1/sqrt(fan_in), 1/sqrt(fan_in)], W is [out, in].
    def linear(key, fan_in, fan_out):
        kw, kb = jax.random.split(key)
        bound = 1.0 / jnp.sqrt(fan_in)
        w = jax.random.uniform(kw, (fan_out, fan_in), jnp.float32, -bound, bound)
        b = jax.random.uniform(kb, (fan_out,), jnp.float32, -bound, bound)
        return w, b

    k1, k2, k3 = jax.random.split(key, 3)
    w1, b1 = linear(k1, N_STATES, HIDDEN)   # [64, 4], [64]
    w2, b2 = linear(k2, HIDDEN, HIDDEN)     # [64, 64], [64]
    w3, b3 = linear(k3, HIDDEN, 1)          # [1, 64], [1]
    return (w1, b1, w2, b2, w3, b3)


def pack_params(params):
    """Pack PyTorch-layout params into the kernel's layout (one consolidated const block)."""
    w1, b1, w2, b2, w3, b3 = params
    consts = jnp.stack(
        [b1, b2, w3.reshape(HIDDEN), jnp.broadcast_to(b3, (HIDDEN,))], axis=1
    ).astype(jnp.float32)                                   # [HIDDEN, 4]: b1 | b2 | w3 | b3
    return (w1.astype(jnp.float32), w2.astype(jnp.float32), consts)


def critic_reference(state, params):
    """Precise numpy reference of the PyTorch forward pass."""
    w1, b1, w2, b2, w3, b3 = (np.asarray(p, np.float64) for p in params)
    s = np.asarray(state, np.float64)
    h1 = np.maximum(s @ w1.T + b1, 0.0)
    h2 = np.maximum(h1 @ w2.T + b2, 0.0)
    return h2 @ w3.T + b3


if __name__ == "__main__":
    key = jax.random.PRNGKey(0)
    kp, kx1, kx2 = jax.random.split(key, 3)
    params = init_params(kp)
    packed = pack_params(params)

    # Small demo batch (single grid step, one 128-lane tile).
    B_small = 8
    state_small = jax.random.normal(kx1, (B_small, N_STATES), jnp.float32)
    val_small = jax.block_until_ready(critic_forward(state_small, packed))
    ref_small = critic_reference(state_small, params)
    assert val_small.shape == (B_small, 1)
    assert np.allclose(np.asarray(val_small), ref_small, rtol=5e-3, atol=5e-4), \
        "small-batch mismatch"

    # Larger ragged batch: multi-step parallel grid + adaptive tiling + padding.
    B_large = 1040
    state_large = jax.random.normal(kx2, (B_large, N_STATES), jnp.float32)
    val_large = jax.block_until_ready(critic_forward(state_large, packed))
    ref_large = critic_reference(state_large, params)
    assert val_large.shape == (B_large, 1)
    assert np.allclose(np.asarray(val_large), ref_large, rtol=5e-3, atol=5e-4), \
        "large-batch mismatch"

    print("KERNEL_OK")
</pallas_src>

<mosaic_0001>
module attributes {stable_mosaic.version = 11 : i64} {
  func.func @critic_kernel(%arg0: i32, %arg1: memref<128x4xf32, #tpu.memory_space<vmem>>, %arg2: memref<64x4xf32, #tpu.memory_space<vmem>>, %arg3: memref<64x64xf32, #tpu.memory_space<vmem>>, %arg4: memref<64x4xf32, #tpu.memory_space<vmem>>, %arg5: memref<1x128xf32, #tpu.memory_space<vmem>>) attributes {dimension_semantics = [#tpu.dimension_semantics<parallel>], iteration_bounds = array<i64: 1>, scalar_prefetch = 0 : i64, scratch_operands = 0 : i64, tpu.core_type = #tpu.core_type<tc>, window_params = [{transform_indices = @transform_0, window_bounds = array<i64: 128, 4>}, {pipeline_mode = #tpu.pipeline_mode<synchronous>, transform_indices = @transform_1, window_bounds = array<i64: 64, 4>}, {pipeline_mode = #tpu.pipeline_mode<synchronous>, transform_indices = @transform_2, window_bounds = array<i64: 64, 64>}, {pipeline_mode = #tpu.pipeline_mode<synchronous>, transform_indices = @transform_3, window_bounds = array<i64: 64, 4>}, {transform_indices = @transform_4, window_bounds = array<i64: 1, 128>}]} {
    %c0 = arith.constant 0 : index
    %c0_0 = arith.constant 0 : index
    %0 = vector.load %arg1[%c0, %c0_0] : memref<128x4xf32, #tpu.memory_space<vmem>>, vector<128x4xf32>
    %c0_1 = arith.constant 0 : index
    %c0_2 = arith.constant 0 : index
    %1 = vector.load %arg4[%c0_1, %c0_2] : memref<64x4xf32, #tpu.memory_space<vmem>>, vector<64x4xf32>
    %2 = vector.extract_strided_slice %1 {offsets = [0, 0], sizes = [64, 1], strides = [1, 1]} : vector<64x4xf32> to vector<64x1xf32>
    %3 = vector.extract_strided_slice %1 {offsets = [0, 1], sizes = [64, 1], strides = [1, 1]} : vector<64x4xf32> to vector<64x1xf32>
    %4 = vector.extract_strided_slice %1 {offsets = [0, 2], sizes = [64, 1], strides = [1, 1]} : vector<64x4xf32> to vector<64x1xf32>
    %5 = vector.extract_strided_slice %1 {offsets = [0, 3], sizes = [1, 1], strides = [1, 1]} : vector<64x4xf32> to vector<1x1xf32>
    %c0_3 = arith.constant 0 : index
    %c0_4 = arith.constant 0 : index
    %6 = vector.load %arg2[%c0_3, %c0_4] : memref<64x4xf32, #tpu.memory_space<vmem>>, vector<64x4xf32>
    %cst = arith.constant dense<0.000000e+00> : vector<64x128xf32>
    %7 = tpu.matmul %6, %0, %cst {dimension_numbers = #tpu.dot_dimension_numbers<[1], [1], [0], [0], [0, 0, 1, 0], [], []>} : vector<64x4xf32>, vector<128x4xf32>, vector<64x128xf32> -> vector<64x128xf32>
    %8 = vector.broadcast %2 : vector<64x1xf32> to vector<64x128xf32>
    %9 = arith.addf %7, %8 : vector<64x128xf32>
    %cst_5 = arith.constant 0.000000e+00 : f32
    %10 = vector.broadcast %cst_5 : f32 to vector<64x128xf32>
    %11 = arith.maximumf %9, %10 : vector<64x128xf32>
    %c0_6 = arith.constant 0 : index
    %c0_7 = arith.constant 0 : index
    %12 = vector.load %arg3[%c0_6, %c0_7] : memref<64x64xf32, #tpu.memory_space<vmem>>, vector<64x64xf32>
    %cst_8 = arith.constant dense<0.000000e+00> : vector<64x128xf32>
    %13 = tpu.matmul %12, %11, %cst_8 {dimension_numbers = #tpu.dot_dimension_numbers<[1], [0], [0], [1], [0, 0, 1, 1], [], []>} : vector<64x64xf32>, vector<64x128xf32>, vector<64x128xf32> -> vector<64x128xf32>
    %14 = vector.broadcast %3 : vector<64x1xf32> to vector<64x128xf32>
    %15 = arith.addf %13, %14 : vector<64x128xf32>
    %cst_9 = arith.constant 0.000000e+00 : f32
    %16 = vector.broadcast %cst_9 : f32 to vector<64x128xf32>
    %17 = arith.maximumf %15, %16 : vector<64x128xf32>
    %18 = vector.broadcast %4 : vector<64x1xf32> to vector<64x128xf32>
    %19 = arith.mulf %18, %17 : vector<64x128xf32>
    %cst_10 = arith.constant dense<0.000000e+00> : vector<128xf32>
    %20 = vector.multi_reduction <add>, %19, %cst_10 [0] : vector<64x128xf32> to vector<128xf32>
    %21 = vector.shape_cast %20 : vector<128xf32> to vector<1x128xf32>
    %22 = vector.broadcast %5 : vector<1x1xf32> to vector<1x128xf32>
    %23 = arith.addf %21, %22 : vector<1x128xf32>
    %c0_11 = arith.constant 0 : index
    %c0_12 = arith.constant 0 : index
    %24 = vector.load %arg5[%c0_11, %c0_12] : memref<1x128xf32, #tpu.memory_space<vmem>>, vector<1x128xf32>
    tpu.vector_store %arg5[%c0_11, %c0_12], %23 {strides = array<i32>} : memref<1x128xf32, #tpu.memory_space<vmem>>, vector<1x128xf32>,
    return
  }
  func.func @transform_0(%arg0: i32) -> (i32, i32) {
    %c0_i32 = arith.constant 0 : i32
    %c0_i32_0 = arith.constant 0 : i32
    return %arg0, %c0_i32 : i32, i32
  }
  func.func @transform_1(%arg0: i32) -> (i32, i32) {
    %c0_i32 = arith.constant 0 : i32
    %c0_i32_0 = arith.constant 0 : i32
    %c0_i32_1 = arith.constant 0 : i32
    return %c0_i32, %c0_i32_0 : i32, i32
  }
  func.func @transform_2(%arg0: i32) -> (i32, i32) {
    %c0_i32 = arith.constant 0 : i32
    %c0_i32_0 = arith.constant 0 : i32
    %c0_i32_1 = arith.constant 0 : i32
    return %c0_i32, %c0_i32_0 : i32, i32
  }
  func.func @transform_3(%arg0: i32) -> (i32, i32) {
    %c0_i32 = arith.constant 0 : i32
    %c0_i32_0 = arith.constant 0 : i32
    %c0_i32_1 = arith.constant 0 : i32
    return %c0_i32, %c0_i32_0 : i32, i32
  }
  func.func @transform_4(%arg0: i32) -> (i32, i32) {
    %c0_i32 = arith.constant 0 : i32
    %c0_i32_0 = arith.constant 0 : i32
    return %c0_i32, %arg0 : i32, i32
  }
}

</mosaic_0001>

<llo_original>
// kernel: critic_forward.1
$region0: #{critic_forward.1}
  #allocation0 [shape = 'u32[]', space=smem, size = 0x4, offset = 0x4, fixed_abs, tag = 'smem constant byte address 0x4 - core index']
  #allocation1 [shape = 'u32[144,128]{1,0:T(1,128)}', space=vmem, size = 0x12000, scoped, tag = 'internal scratch']
  %s0 = inlined_call_operand.vmem [shape: f32[128,4], index: 0, kind: input, shape index: {}]
  %s1 = inlined_call_operand.vmem [shape: f32[64,4], index: 1, kind: input, shape index: {}]
  %s2 = inlined_call_operand.vmem [shape: f32[64,64], index: 2, kind: input, shape index: {}]
  %s3 = inlined_call_operand.vmem [shape: f32[64,4], index: 3, kind: input, shape index: {}]
  %s4 = inlined_call_operand.vmem [shape: f32[1,128], index: 4, kind: output, shape index: {}]
  %s5 = sld [smem:[#allocation0]]
  $region26: #{critic_forward.1} parent=0
    _
  %s7 = ssub.s32 1, %s5
  %s8 = scalar_select 0, %s7, %s5
  // Predicated region
  $region2: #{critic_forward.1} parent=0 // pred_check
    _
  $region3: #{critic_forward.1} parent=0 // pred_check_branch
    %10 = sbr.rel (0) target = $region5
  $region4: #{critic_forward.1} parent=0 // pred_region
    _
  $region5: #{critic_forward.1} parent=0 // pred_fallthru
    _
  // Predicated region
  $region6: #{critic_forward.1} parent=0 // pred_check
    _
  $region7: #{critic_forward.1} parent=0 // pred_check_branch
    %12 = sbr.rel (0) target = $region9
  $region8: #{critic_forward.1} parent=0 // pred_region
    _
  $region9: #{critic_forward.1} parent=0 // pred_fallthru
    _
  // Predicated region
  $region10: #{critic_forward.1} parent=0 // pred_check
    _
  $region11: #{critic_forward.1} parent=0 // pred_check_branch
    %14 = sbr.rel (0) target = $region13
  $region12: #{critic_forward.1} parent=0 // pred_region
    _
  $region13: #{critic_forward.1} parent=0 // pred_fallthru
    _
  // Predicated region
  $region14: #{critic_forward.1} parent=0 // pred_check
    _
  $region15: #{critic_forward.1} parent=0 // pred_check_branch
    %16 = sbr.rel (0) target = $region17
  $region16: #{critic_forward.1} parent=0 // pred_region
    _
  $region17: #{critic_forward.1} parent=0 // pred_fallthru
    _
  %v17 = vld [vmem:[%s0] sm:$0xff]
  %v18 = vld [vmem:[%s0 + $0x8] sm:$0xff]
  %v19 = vld [vmem:[%s0 + $0x10] sm:$0xff]
  %v20 = vld [vmem:[%s0 + $0x18] sm:$0xff]
  %v21 = vld [vmem:[%s0 + $0x20] sm:$0xff]
  %v22 = vld [vmem:[%s0 + $0x28] sm:$0xff]
  %v23 = vld [vmem:[%s0 + $0x30] sm:$0xff]
  %v24 = vld [vmem:[%s0 + $0x38] sm:$0xff]
  %v25 = vld [vmem:[%s0 + $0x40] sm:$0xff]
  %v26 = vld [vmem:[%s0 + $0x48] sm:$0xff]
  %v27 = vld [vmem:[%s0 + $0x50] sm:$0xff]
  %v28 = vld [vmem:[%s0 + $0x58] sm:$0xff]
  %v29 = vld [vmem:[%s0 + $0x60] sm:$0xff]
  %v30 = vld [vmem:[%s0 + $0x68] sm:$0xff]
  %v31 = vld [vmem:[%s0 + $0x70] sm:$0xff]
  %v32 = vld [vmem:[%s0 + $0x78] sm:$0xff]
  %v33 = vld [vmem:[%s3] sm:$0xff]
  %v34 = vld [vmem:[%s3 + $0x8] sm:$0xff]
  %v35 = vld [vmem:[%s3 + $0x10] sm:$0xff]
  %v36 = vld [vmem:[%s3 + $0x18] sm:$0xff]
  %v37 = vld [vmem:[%s3 + $0x20] sm:$0xff]
  %v38 = vld [vmem:[%s3 + $0x28] sm:$0xff]
  %v39 = vld [vmem:[%s3 + $0x30] sm:$0xff]
  %v40 = vld [vmem:[%s3 + $0x38] sm:$0xff]
  %v41 = vld [vmem:[%s1] sm:$0xff]
  %v42 = vld [vmem:[%s1 + $0x8] sm:$0xff]
  %v43 = vld [vmem:[%s1 + $0x10] sm:$0xff]
  %v44 = vld [vmem:[%s1 + $0x18] sm:$0xff]
  %v45 = vld [vmem:[%s1 + $0x20] sm:$0xff]
  %v46 = vld [vmem:[%s1 + $0x28] sm:$0xff]
  %v47 = vld [vmem:[%s1 + $0x30] sm:$0xff]
  %v48 = vld [vmem:[%s1 + $0x38] sm:$0xff]
  %50 = vset.pattern.permute.xlu0 0
  %51 = vperm.xlu0 %50, %v33
  %v52 = vpop.permute.xlu0 %51
  %55 = vset.pattern.permute.xlu0 0
  %56 = vperm.xlu0 %55, %v34
  %v57 = vpop.permute.xlu0 %56
  %60 = vset.pattern.permute.xlu0 0
  %61 = vperm.xlu0 %60, %v35
  %v62 = vpop.permute.xlu0 %61
  %65 = vset.pattern.permute.xlu0 0
  %66 = vperm.xlu0 %65, %v36
  %v67 = vpop.permute.xlu0 %66
  %70 = vset.pattern.permute.xlu0 0
  %71 = vperm.xlu0 %70, %v37
  %v72 = vpop.permute.xlu0 %71
  %75 = vset.pattern.permute.xlu0 0
  %76 = vperm.xlu0 %75, %v38
  %v77 = vpop.permute.xlu0 %76
  %80 = vset.pattern.permute.xlu0 0
  %81 = vperm.xlu0 %80, %v39
  %v82 = vpop.permute.xlu0 %81
  %85 = vset.pattern.permute.xlu0 0
  %86 = vperm.xlu0 %85, %v40
  %v87 = vpop.permute.xlu0 %86
  %vm89 = vcmask 31744
  %v91 = vsel %vm89, %v41, 0
  %v94 = vsel %vm89, %v42, 0
  %v97 = vsel %vm89, %v43, 0
  %v100 = vsel %vm89, %v44, 0
  %v103 = vsel %vm89, %v45, 0
  %v106 = vsel %vm89, %v46, 0
  %v109 = vsel %vm89, %v47, 0
  %v112 = vsel %vm89, %v48, 0
  %v115 = vsel %vm89, %v17, 0
  %v118 = vsel %vm89, %v18, 0
  %v121 = vsel %vm89, %v19, 0
  %v124 = vsel %vm89, %v20, 0
  %v127 = vsel %vm89, %v21, 0
  %v130 = vsel %vm89, %v22, 0
  %v133 = vsel %vm89, %v23, 0
  %v136 = vsel %vm89, %v24, 0
  %v139 = vsel %vm89, %v25, 0
  %v142 = vsel %vm89, %v26, 0
  %v145 = vsel %vm89, %v27, 0
  %v148 = vsel %vm89, %v28, 0
  %v151 = vsel %vm89, %v29, 0
  %v154 = vsel %vm89, %v30, 0
  %v157 = vsel %vm89, %v31, 0
  %v160 = vsel %vm89, %v32, 0
  %162 = vmatprep.subr.mxu0 0.0
  %163 = vmatpush1.xpose.msra.mxu0 %v115
  %164 = vmatprep.subr.mxu0 0.0
  %165 = vmatpush1.xpose.msra.mxu0 %v118
  %166 = vmatprep.subr.mxu0 0.0
  %167 = vmatpush1.xpose.msra.mxu0 %v121
  %168 = vmatprep.subr.mxu0 0.0
  %169 = vmatpush1.xpose.msra.mxu0 %v124
  %170 = vmatprep.subr.mxu0 0.0
  %171 = vmatpush1.xpose.msra.mxu0 %v127
  %172 = vmatprep.subr.mxu0 0.0
  %173 = vmatpush1.xpose.msra.mxu0 %v130
  %174 = vmatprep.subr.mxu0 0.0
  %175 = vmatpush1.xpose.msra.mxu0 %v133
  %176 = vmatprep.subr.mxu0 0.0
  %177 = vmatpush1.xpose.msra.mxu0 %v136
  %178 = vmatprep.subr.mxu0 0.0
  %179 = vmatpush1.xpose.msra.mxu0 %v139
  %180 = vmatprep.subr.mxu0 0.0
  %181 = vmatpush1.xpose.msra.mxu0 %v142
  %182 = vmatprep.subr.mxu0 0.0
  %183 = vmatpush1.xpose.msra.mxu0 %v145
  %184 = vmatprep.subr.mxu0 0.0
  %185 = vmatpush1.xpose.msra.mxu0 %v148
  %186 = vmatprep.subr.mxu0 0.0
  %187 = vmatpush1.xpose.msra.mxu0 %v151
  %188 = vmatprep.subr.mxu0 0.0
  %189 = vmatpush1.xpose.msra.mxu0 %v154
  %190 = vmatprep.subr.mxu0 0.0
  %191 = vmatpush1.xpose.msra.mxu0 %v157
  %192 = vmatprep.subr.mxu0 0.0
  %193 = vmatpush1.xpose.msra.mxu0 %v160
  %194 = vmatprep.subr.mxu0 0.0
  %195 = vmatpush1.xpose.msra.mxu0 0.0
  %196 = vmatprep.subr.mxu0 0.0
  %197 = vmatpush1.xpose.msra.mxu0 0.0
  %198 = vmatprep.subr.mxu0 0.0
  %199 = vmatpush1.xpose.msra.mxu0 0.0
  %200 = vmatprep.subr.mxu0 0.0
  %201 = vmatpush1.xpose.msra.mxu0 0.0
  %202 = vmatprep.subr.mxu0 0.0
  %203 = vmatpush1.xpose.msra.mxu0 0.0
  %204 = vmatprep.subr.mxu0 0.0
  %205 = vmatpush1.xpose.msra.mxu0 0.0
  %206 = vmatprep.subr.mxu0 0.0
  %207 = vmatpush1.xpose.msra.mxu0 0.0
  %208 = vmatprep.subr.mxu0 0.0
  %209 = vmatpush1.xpose.msra.mxu0 0.0
  %210 = vmatprep.subr.mxu0 0.0
  %211 = vmatpush1.xpose.msra.mxu0 0.0
  %212 = vmatprep.subr.mxu0 0.0
  %213 = vmatpush1.xpose.msra.mxu0 0.0
  %214 = vmatprep.subr.mxu0 0.0
  %215 = vmatpush1.xpose.msra.mxu0 0.0
  %216 = vmatprep.subr.mxu0 0.0
  %217 = vmatpush1.xpose.msra.mxu0 0.0
  %218 = vmatprep.subr.mxu0 0.0
  %219 = vmatpush1.xpose.msra.mxu0 0.0
  %220 = vmatprep.subr.mxu0 0.0
  %221 = vmatpush1.xpose.msra.mxu0 0.0
  %222 = vmatprep.subr.mxu0 0.0
  %223 = vmatpush1.xpose.msra.mxu0 0.0
  %224 = vmatprep.subr.mxu0 0.0
  %225 = vmatpush1.xpose.msra.mxu0 0.0
  %226 = vmatprep.mubr.f32.mxu0 0.0
  %227 = vmatmul.mubr.f32.gmra.mrb[0].mxu0 %v91
  %v228 = vpop.f32.mrb[0].mxu0
  %v229 = vadd.f32 %v52, %v228
  %v230 = vpop.f32.mrb[0].mxu0
  %231 = vmatprep.mubr.f32.mxu0 0.0
  %232 = vmatmul.mubr.f32.gmra.mrb[0].mxu0 %v94
  %v233 = vpop.f32.mrb[0].mxu0
  %v234 = vadd.f32 %v57, %v233
  %v235 = vpop.f32.mrb[0].mxu0
  %236 = vmatprep.mubr.f32.mxu0 0.0
  %237 = vmatmul.mubr.f32.gmra.mrb[0].mxu0 %v97
  %v238 = vpop.f32.mrb[0].mxu0
  %v239 = vadd.f32 %v62, %v238
  %v240 = vpop.f32.mrb[0].mxu0
  %241 = vmatprep.mubr.f32.mxu0 0.0
  %242 = vmatmul.mubr.f32.gmra.mrb[0].mxu0 %v100
  %v243 = vpop.f32.mrb[0].mxu0
  %v244 = vadd.f32 %v67, %v243
  %v245 = vpop.f32.mrb[0].mxu0
  %246 = vmatprep.mubr.f32.mxu0 0.0
  %247 = vmatmul.mubr.f32.gmra.mrb[0].mxu0 %v103
  %v248 = vpop.f32.mrb[0].mxu0
  %v249 = vadd.f32 %v72, %v248
  %v250 = vpop.f32.mrb[0].mxu0
  %251 = vmatprep.mubr.f32.mxu0 0.0
  %252 = vmatmul.mubr.f32.gmra.mrb[0].mxu0 %v106
  %v253 = vpop.f32.mrb[0].mxu0
  %v254 = vadd.f32 %v77, %v253
  %v255 = vpop.f32.mrb[0].mxu0
  %256 = vmatprep.mubr.f32.mxu0 0.0
  %257 = vmatmul.mubr.f32.gmra.mrb[0].mxu0 %v109
  %v258 = vpop.f32.mrb[0].mxu0
  %v259 = vadd.f32 %v82, %v258
  %v260 = vpop.f32.mrb[0].mxu0
  %261 = vmatprep.mubr.f32.mxu0 0.0
  %262 = vmatmul.mubr.f32.gmra.mrb[0].mxu0 %v112
  %v263 = vpop.f32.mrb[0].mxu0
  %v264 = vadd.f32 %v87, %v263
  %v265 = vpop.f32.mrb[0].mxu0
  %266 = vdwg.mxu0
  %v267 = vmax.f32 %v229, 0.0
  %v268 = vmax.f32 %v234, 0.0
  %v269 = vmax.f32 %v239, 0.0
  %v270 = vmax.f32 %v244, 0.0
  %v271 = vmax.f32 %v249, 0.0
  %v272 = vmax.f32 %v254, 0.0
  %v273 = vmax.f32 %v259, 0.0
  %v274 = vmax.f32 %v264, 0.0
  %v275 = vld [vmem:[%s2] sm:$0xff]
  %v276 = vld [vmem:[%s2 + $0x8] sm:$0xff]
  %v277 = vld [vmem:[%s2 + $0x10] sm:$0xff]
  %v278 = vld [vmem:[%s2 + $0x18] sm:$0xff]
  %v279 = vld [vmem:[%s2 + $0x20] sm:$0xff]
  %v280 = vld [vmem:[%s2 + $0x28] sm:$0xff]
  %v281 = vld [vmem:[%s2 + $0x30] sm:$0xff]
  %v282 = vld [vmem:[%s2 + $0x38] sm:$0xff]
  %283 = vset.pattern.permute.xlu0 1
  %284 = vperm.xlu0 %283, %v33
  %v285 = vpop.permute.xlu0 %284
  %287 = vset.pattern.permute.xlu0 1
  %288 = vperm.xlu0 %287, %v34
  %v289 = vpop.permute.xlu0 %288
  %291 = vset.pattern.permute.xlu0 1
  %292 = vperm.xlu0 %291, %v35
  %v293 = vpop.permute.xlu0 %292
  %295 = vset.pattern.permute.xlu0 1
  %296 = vperm.xlu0 %295, %v36
  %v297 = vpop.permute.xlu0 %296
  %299 = vset.pattern.permute.xlu0 1
  %300 = vperm.xlu0 %299, %v37
  %v301 = vpop.permute.xlu0 %300
  %303 = vset.pattern.permute.xlu0 1
  %304 = vperm.xlu0 %303, %v38
  %v305 = vpop.permute.xlu0 %304
  %307 = vset.pattern.permute.xlu0 1
  %308 = vperm.xlu0 %307, %v39
  %v309 = vpop.permute.xlu0 %308
  %311 = vset.pattern.permute.xlu0 1
  %312 = vperm.xlu0 %311, %v40
  %v313 = vpop.permute.xlu0 %312
  %vm315 = vcmask 523264
  %v317 = vsel %vm315, %v275, 0
  %v320 = vsel %vm315, %v276, 0
  %v323 = vsel %vm315, %v277, 0
  %v326 = vsel %vm315, %v278, 0
  %v329 = vsel %vm315, %v279, 0
  %v332 = vsel %vm315, %v280, 0
  %v335 = vsel %vm315, %v281, 0
  %v338 = vsel %vm315, %v282, 0
  %340 = vmatprep.subr.mxu0 0.0
  %341 = vmatpush1.msra.mxu0 %v267
  %342 = vmatprep.subr.mxu0 0.0
  %343 = vmatpush1.msra.mxu0 %v268
  %344 = vmatprep.subr.mxu0 0.0
  %345 = vmatpush1.msra.mxu0 %v269
  %346 = vmatprep.subr.mxu0 0.0
  %347 = vmatpush1.msra.mxu0 %v270
  %348 = vmatprep.subr.mxu0 0.0
  %349 = vmatpush1.msra.mxu0 %v271
  %350 = vmatprep.subr.mxu0 0.0
  %351 = vmatpush1.msra.mxu0 %v272
  %352 = vmatprep.subr.mxu0 0.0
  %353 = vmatpush1.msra.mxu0 %v273
  %354 = vmatprep.subr.mxu0 0.0
  %355 = vmatpush1.msra.mxu0 %v274
  %356 = vmatprep.subr.mxu0 0.0
  %357 = vmatpush1.msra.mxu0 0.0
  %358 = vmatprep.subr.mxu0 0.0
  %359 = vmatpush1.msra.mxu0 0.0
  %360 = vmatprep.subr.mxu0 0.0
  %361 = vmatpush1.msra.mxu0 0.0
  %362 = vmatprep.subr.mxu0 0.0
  %363 = vmatpush1.msra.mxu0 0.0
  %364 = vmatprep.subr.mxu0 0.0
  %365 = vmatpush1.msra.mxu0 0.0
  %366 = vmatprep.subr.mxu0 0.0
  %367 = vmatpush1.msra.mxu0 0.0
  %368 = vmatprep.subr.mxu0 0.0
  %369 = vmatpush1.msra.mxu0 0.0
  %370 = vmatprep.subr.mxu0 0.0
  %371 = vmatpush1.msra.mxu0 0.0
  %372 = vmatprep.subr.mxu0 0.0
  %373 = vmatpush1.msra.mxu0 0.0
  %374 = vmatprep.subr.mxu0 0.0
  %375 = vmatpush1.msra.mxu0 0.0
  %376 = vmatprep.subr.mxu0 0.0
  %377 = vmatpush1.msra.mxu0 0.0
  %378 = vmatprep.subr.mxu0 0.0
  %379 = vmatpush1.msra.mxu0 0.0
  %380 = vmatprep.subr.mxu0 0.0
  %381 = vmatpush1.msra.mxu0 0.0
  %382 = vmatprep.subr.mxu0 0.0
  %383 = vmatpush1.msra.mxu0 0.0
  %384 = vmatprep.subr.mxu0 0.0
  %385 = vmatpush1.msra.mxu0 0.0
  %386 = vmatprep.subr.mxu0 0.0
  %387 = vmatpush1.msra.mxu0 0.0
  %388 = vmatprep.subr.mxu0 0.0
  %389 = vmatpush1.msra.mxu0 0.0
  %390 = vmatprep.subr.mxu0 0.0
  %391 = vmatpush1.msra.mxu0 0.0
  %392 = vmatprep.subr.mxu0 0.0
  %393 = vmatpush1.msra.mxu0 0.0
  %394 = vmatprep.subr.mxu0 0.0
  %395 = vmatpush1.msra.mxu0 0.0
  %396 = vmatprep.subr.mxu0 0.0
  %397 = vmatpush1.msra.mxu0 0.0
  %398 = vmatprep.subr.mxu0 0.0
  %399 = vmatpush1.msra.mxu0 0.0
  %400 = vmatprep.subr.mxu0 0.0
  %401 = vmatpush1.msra.mxu0 0.0
  %402 = vmatprep.subr.mxu0 0.0
  %403 = vmatpush1.msra.mxu0 0.0
  %404 = vmatprep.mubr.f32.mxu0 0.0
  %405 = vmatmul.mubr.f32.gmra.mrb[0].mxu0 %v317
  %v406 = vpop.f32.mrb[0].mxu0
  %v407 = vadd.f32 %v285, %v406
  %v408 = vpop.f32.mrb[0].mxu0
  %409 = vmatprep.mubr.f32.mxu0 0.0
  %410 = vmatmul.mubr.f32.gmra.mrb[0].mxu0 %v320
  %v411 = vpop.f32.mrb[0].mxu0
  %v412 = vadd.f32 %v289, %v411
  %v413 = vpop.f32.mrb[0].mxu0
  %414 = vmatprep.mubr.f32.mxu0 0.0
  %415 = vmatmul.mubr.f32.gmra.mrb[0].mxu0 %v323
  %v416 = vpop.f32.mrb[0].mxu0
  %v417 = vadd.f32 %v293, %v416
  %v418 = vpop.f32.mrb[0].mxu0
  %419 = vmatprep.mubr.f32.mxu0 0.0
  %420 = vmatmul.mubr.f32.gmra.mrb[0].mxu0 %v326
  %v421 = vpop.f32.mrb[0].mxu0
  %v422 = vadd.f32 %v297, %v421
  %v423 = vpop.f32.mrb[0].mxu0
  %424 = vmatprep.mubr.f32.mxu0 0.0
  %425 = vmatmul.mubr.f32.gmra.mrb[0].mxu0 %v329
  %v426 = vpop.f32.mrb[0].mxu0
  %v427 = vadd.f32 %v301, %v426
  %v428 = vpop.f32.mrb[0].mxu0
  %429 = vmatprep.mubr.f32.mxu0 0.0
  %430 = vmatmul.mubr.f32.gmra.mrb[0].mxu0 %v332
  %v431 = vpop.f32.mrb[0].mxu0
  %v432 = vadd.f32 %v305, %v431
  %v433 = vpop.f32.mrb[0].mxu0
  %434 = vmatprep.mubr.f32.mxu0 0.0
  %435 = vmatmul.mubr.f32.gmra.mrb[0].mxu0 %v335
  %v436 = vpop.f32.mrb[0].mxu0
  %v437 = vadd.f32 %v309, %v436
  %v438 = vpop.f32.mrb[0].mxu0
  %439 = vmatprep.mubr.f32.mxu0 0.0
  %440 = vmatmul.mubr.f32.gmra.mrb[0].mxu0 %v338
  %v441 = vpop.f32.mrb[0].mxu0
  %v442 = vadd.f32 %v313, %v441
  %v443 = vpop.f32.mrb[0].mxu0
  %444 = vdwg.mxu0
  %v445 = vmax.f32 %v407, 0.0
  %v446 = vmax.f32 %v412, 0.0
  %v447 = vmax.f32 %v417, 0.0
  %v448 = vmax.f32 %v422, 0.0
  %v449 = vmax.f32 %v427, 0.0
  %v450 = vmax.f32 %v432, 0.0
  %v451 = vmax.f32 %v437, 0.0
  %v452 = vmax.f32 %v442, 0.0
  %453 = vset.pattern.permute.xlu0 2
  %454 = vperm.xlu0 %453, %v33
  %v455 = vpop.permute.xlu0 %454
  %457 = vset.pattern.permute.xlu0 2
  %458 = vperm.xlu0 %457, %v34
  %v459 = vpop.permute.xlu0 %458
  %461 = vset.pattern.permute.xlu0 2
  %462 = vperm.xlu0 %461, %v35
  %v463 = vpop.permute.xlu0 %462
  %465 = vset.pattern.permute.xlu0 2
  %466 = vperm.xlu0 %465, %v36
  %v467 = vpop.permute.xlu0 %466
  %469 = vset.pattern.permute.xlu0 2
  %470 = vperm.xlu0 %469, %v37
  %v471 = vpop.permute.xlu0 %470
  %473 = vset.pattern.permute.xlu0 2
  %474 = vperm.xlu0 %473, %v38
  %v475 = vpop.permute.xlu0 %474
  %477 = vset.pattern.permute.xlu0 2
  %478 = vperm.xlu0 %477, %v39
  %v479 = vpop.permute.xlu0 %478
  %481 = vset.pattern.permute.xlu0 2
  %482 = vperm.xlu0 %481, %v40
  %v483 = vpop.permute.xlu0 %482
  %v485 = vmul.f32 %v455, %v445
  %v486 = vmul.f32 %v459, %v446
  %v487 = vmul.f32 %v463, %v447
  %v488 = vmul.f32 %v467, %v448
  %v489 = vmul.f32 %v471, %v449
  %v490 = vmul.f32 %v475, %v450
  %v491 = vmul.f32 %v479, %v451
  %v492 = vmul.f32 %v483, %v452
  %v493 = vadd.f32 %v485, %v486
  %v494 = vadd.f32 %v493, %v487
  %v495 = vadd.f32 %v494, %v488
  %v496 = vadd.f32 %v495, %v489
  %v497 = vadd.f32 %v496, %v490
  %v498 = vadd.f32 %v497, %v491
  %v499 = vadd.f32 %v498, %v492
  %v500 = vrot.slane %v499, 4
  %v501 = vadd.f32 %v499, %v500
  %v502 = vrot.slane %v501, 2
  %v503 = vadd.f32 %v501, %v502
  %v504 = vrot.slane %v503, 1
  %v505 = vadd.f32 %v503, %v504
  %506 = vset.pattern.permute.xlu0 3
  %507 = vperm.xlu0 %506, %v33
  %v508 = vpop.permute.xlu0 %507
  %v510 = vadd.f32 %v505, %v508
  %511 = vst [vmem:[%s4] sm:$0x1] %v510
  // Predicated region
  $region18: #{critic_forward.1} parent=0 // pred_check
    _
  $region19: #{critic_forward.1} parent=0 // pred_check_branch
    %513 = sbr.rel (0) target = $region21
  $region20: #{critic_forward.1} parent=0 // pred_region
    _
  $region21: #{critic_forward.1} parent=0 // pred_fallthru
    _
  // Predicated region
  $region22: #{critic_forward.1} parent=0 // pred_check
    _
  $region23: #{critic_forward.1} parent=0 // pred_check_branch
    %515 = sbr.rel (0) target = $region25
  $region24: #{critic_forward.1} parent=0 // pred_region
    _
  $region25: #{critic_forward.1} parent=0 // pred_fallthru
    _

</llo_original>
